<compile_context>
chip_gen: v6e
topology: v6e:2x2x1
jax: 0.10.0
libtpu: 0.0.40
codegen_flags: <defaults>
</compile_context>

<pallas_src>
import jax
import jax.numpy as jnp
import numpy as np
from jax.experimental import pallas as pl
from jax.experimental.pallas import tpu as pltpu


_VMEM_LIMIT = 32 * 1024 * 1024  # explicit scoped-VMEM budget (fits v5e/v6e/v7x)


def _pick_hw_tile(hw, max_lanes=4096):
    """Largest lane-dense tile of the spatial axis.

    If hw is small or not a multiple of 128, use the full axis (full-dim
    blocks are always legal).  Otherwise pick the largest multiple-of-128
    divisor of hw that is <= max_lanes so the grid pipelines with a small,
    double-bufferable per-step footprint.
    """
    if hw <= max_lanes or hw % 128 != 0:
        return hw
    t = max_lanes - (max_lanes % 128)
    while t >= 128:
        if hw % t == 0:
            return t
        t -= 128
    return hw


def _make_stats_kernel(eps: float, inv_m: float):
    def stats_kernel(x_ref, gamma_ref, beta_ref,
                     scale_ref, shift_ref, mean_ref, var_ref,
                     sum_ref, sumsq_ref):
        n_id = pl.program_id(0)
        t_id = pl.program_id(1)

        @pl.when((n_id == 0) & (t_id == 0))
        def _():
            sum_ref[...] = jnp.zeros_like(sum_ref)
            sumsq_ref[...] = jnp.zeros_like(sumsq_ref)

        # x_ref: (C, hw_tile) — single sweep accumulates sum and sum-of-squares.
        x = x_ref[...].astype(jnp.float32)
        sum_ref[...] += jnp.sum(x, axis=1, keepdims=True)
        sumsq_ref[...] += jnp.sum(x * x, axis=1, keepdims=True)

        @pl.when((n_id == pl.num_programs(0) - 1) &
                 (t_id == pl.num_programs(1) - 1))
        def _():
            mean = sum_ref[...] * inv_m                       # (C, 1)
            var = sumsq_ref[...] * inv_m - mean * mean        # biased (E[x^2]-mean^2)
            var = jnp.maximum(var, 0.0)                       # guard f32 cancellation
            scale = gamma_ref[...] * jax.lax.rsqrt(var + eps)
            shift = beta_ref[...] - mean * scale
            mean_ref[...] = mean
            var_ref[...] = var
            scale_ref[...] = scale
            shift_ref[...] = shift
    return stats_kernel


def _normalize_kernel(x_ref, scale_ref, shift_ref, y_ref):
    # x_ref: (C, hw_tile), scale/shift: (C, 1) — 2 VALU ops per element,
    # lane-dense unmasked stores when hw_tile % 128 == 0.
    x = x_ref[...].astype(jnp.float32)
    y_ref[...] = (x * scale_ref[...] + shift_ref[...]).astype(y_ref.dtype)


def batchnorm_pallas(x_nchw, gamma, beta, *, eps=1e-5, momentum=0.1,
                     r_mean=0.0, r_var=0.0):
    """Training-mode BatchNorm forward matching the PyTorch module.

    x_nchw: (N, C, H, W);  gamma, beta: (1, C, 1, 1).
    Returns (y_nchw, new_r_mean, new_r_var); running stats keep the
    (1, C, 1, 1) shape like the torch module's buffers.
    """
    N, C, H, W = x_nchw.shape
    HW = H * W
    M = N * HW

    # Free views — no transpose, no extra HBM traffic.
    x3d = x_nchw.reshape(N, C, HW)
    gamma2d = gamma.reshape(C, 1).astype(jnp.float32)
    beta2d = beta.reshape(C, 1).astype(jnp.float32)

    hw_tile = _pick_hw_tile(HW)
    n_t = HW // hw_tile
    grid = (N, n_t)

    # x/y tiles: squeeze N, channels on sublanes, spatial on lanes.
    x_spec = pl.BlockSpec((None, C, hw_tile), lambda n, t: (n, 0, t))
    cvec_spec = pl.BlockSpec((C, 1), lambda n, t: (0, 0))

    # ---- Pass 1: per-channel statistics + fused scale/shift -----------------
    scale2d, shift2d, mean2d, var2d = pl.pallas_call(
        _make_stats_kernel(float(eps), 1.0 / float(M)),
        out_shape=(
            jax.ShapeDtypeStruct((C, 1), jnp.float32),   # scale
            jax.ShapeDtypeStruct((C, 1), jnp.float32),   # shift
            jax.ShapeDtypeStruct((C, 1), jnp.float32),   # mean
            jax.ShapeDtypeStruct((C, 1), jnp.float32),   # var (biased)
        ),
        grid_spec=pltpu.PrefetchScalarGridSpec(
            num_scalar_prefetch=0,
            grid=grid,
            in_specs=[x_spec, cvec_spec, cvec_spec],
            out_specs=(cvec_spec, cvec_spec, cvec_spec, cvec_spec),
            scratch_shapes=[pltpu.VMEM((C, 1), jnp.float32),
                            pltpu.VMEM((C, 1), jnp.float32)],
        ),
        compiler_params=pltpu.CompilerParams(
            dimension_semantics=("arbitrary", "arbitrary"),  # reduction accumulator
            vmem_limit_bytes=_VMEM_LIMIT),
    )(x3d, gamma2d, beta2d)

    # ---- Pass 2: elementwise normalize (parallel over tiles / v7x cores) ----
    y3d = pl.pallas_call(
        _normalize_kernel,
        out_shape=jax.ShapeDtypeStruct((N, C, HW), x_nchw.dtype),
        grid_spec=pltpu.PrefetchScalarGridSpec(
            num_scalar_prefetch=0,
            grid=grid,
            in_specs=[x_spec, cvec_spec, cvec_spec],
            out_specs=x_spec,
        ),
        compiler_params=pltpu.CompilerParams(
            dimension_semantics=("parallel", "parallel"),
            vmem_limit_bytes=_VMEM_LIMIT),
    )(x3d, scale2d, shift2d)

    y = y3d.reshape(N, C, H, W)  # free view back to NCHW

    # Running-statistic update (plain JAX glue; matches torch: unbiased
    # n/(n-1) correction applied only to the running variance).
    # TODO(synk): n == 1 makes n/(n-1) degenerate, exactly as in the torch module.
    n = float(M)
    mean_k = mean2d.reshape(1, C, 1, 1)
    var_k = var2d.reshape(1, C, 1, 1)
    new_r_mean = momentum * mean_k + (1.0 - momentum) * r_mean
    new_r_var = momentum * (n / (n - 1.0)) * var_k + (1.0 - momentum) * r_var
    return y, new_r_mean, new_r_var


def batchnorm_ref(x, gamma, beta, eps=1e-5):
    mean = jnp.mean(x, axis=(0, 2, 3), keepdims=True)
    var = jnp.var(x, axis=(0, 2, 3), keepdims=True)  # biased
    y = (x - mean) / jnp.sqrt(var + eps)
    return y * gamma + beta


if __name__ == "__main__":
    key = jax.random.PRNGKey(0)
    N, C, H, W = 2, 4, 16, 16
    x = jax.random.normal(key, (N, C, H, W), dtype=jnp.float32) * 2.0 + 0.5

    # Deterministic parameter init, as in the module's __init__:
    # gamma = ones, beta = zeros, shape (1, C, 1, 1).
    gamma = jnp.ones((1, C, 1, 1), dtype=jnp.float32)
    beta = jnp.zeros((1, C, 1, 1), dtype=jnp.float32)

    y, r_mean, r_var = batchnorm_pallas(x, gamma, beta, eps=1e-5, momentum=0.1)
    y = jax.block_until_ready(y)
    jax.block_until_ready(r_mean)
    jax.block_until_ready(r_var)

    y_ref = batchnorm_ref(x, gamma, beta, eps=1e-5)
    np.testing.assert_allclose(np.asarray(y), np.asarray(y_ref),
                               rtol=1e-5, atol=1e-4)
    print("KERNEL_OK")
</pallas_src>

<mosaic_0001>
module attributes {stable_mosaic.version = 11 : i64} {
  func.func @stats_kernel(%arg0: i32, %arg1: i32, %arg2: memref<1x4x256xf32, #tpu.memory_space<vmem>>, %arg3: memref<4x1xf32, #tpu.memory_space<vmem>>, %arg4: memref<4x1xf32, #tpu.memory_space<vmem>>, %arg5: memref<4x1xf32, #tpu.memory_space<vmem>>, %arg6: memref<4x1xf32, #tpu.memory_space<vmem>>, %arg7: memref<4x1xf32, #tpu.memory_space<vmem>>, %arg8: memref<4x1xf32, #tpu.memory_space<vmem>>, %arg9: memref<4x1xf32, #tpu.memory_space<vmem>>, %arg10: memref<4x1xf32, #tpu.memory_space<vmem>>) attributes {dimension_semantics = [#tpu.dimension_semantics<arbitrary>, #tpu.dimension_semantics<arbitrary>], iteration_bounds = array<i64: 2, 1>, scalar_prefetch = 0 : i64, scratch_operands = 2 : i64, tpu.core_type = #tpu.core_type<tc>, window_params = [{transform_indices = @transform_0, window_bounds = array<i64: 1, 4, 256>}, {pipeline_mode = #tpu.pipeline_mode<synchronous>, transform_indices = @transform_1, window_bounds = array<i64: 4, 1>}, {pipeline_mode = #tpu.pipeline_mode<synchronous>, transform_indices = @transform_2, window_bounds = array<i64: 4, 1>}, {pipeline_mode = #tpu.pipeline_mode<synchronous>, transform_indices = @transform_3, window_bounds = array<i64: 4, 1>}, {pipeline_mode = #tpu.pipeline_mode<synchronous>, transform_indices = @transform_4, window_bounds = array<i64: 4, 1>}, {pipeline_mode = #tpu.pipeline_mode<synchronous>, transform_indices = @transform_5, window_bounds = array<i64: 4, 1>}, {pipeline_mode = #tpu.pipeline_mode<synchronous>, transform_indices = @transform_6, window_bounds = array<i64: 4, 1>}]} {
    %c0_i32 = arith.constant 0 : i32
    %0 = arith.cmpi eq, %arg0, %c0_i32 : i32
    %c0_i32_0 = arith.constant 0 : i32
    %1 = arith.cmpi eq, %arg1, %c0_i32_0 : i32
    %2 = arith.andi %0, %1 : i1
    %3 = arith.extui %2 : i1 to i32
    %c0_i32_1 = arith.constant 0 : i32
    %4 = arith.cmpi ne, %3, %c0_i32_1 : i32
    scf.if %4 {
      %cst_15 = arith.constant 0.000000e+00 : f32
      %23 = vector.broadcast %cst_15 : f32 to vector<4x1xf32>
      %c0_16 = arith.constant 0 : index
      %c0_17 = arith.constant 0 : index
      %24 = vector.load %arg9[%c0_16, %c0_17] : memref<4x1xf32, #tpu.memory_space<vmem>>, vector<4x1xf32>
      tpu.vector_store %arg9[%c0_16, %c0_17], %23 {strides = array<i32>} : memref<4x1xf32, #tpu.memory_space<vmem>>, vector<4x1xf32>,
      %cst_18 = arith.constant 0.000000e+00 : f32
      %25 = vector.broadcast %cst_18 : f32 to vector<4x1xf32>
      %c0_19 = arith.constant 0 : index
      %c0_20 = arith.constant 0 : index
      %26 = vector.load %arg10[%c0_19, %c0_20] : memref<4x1xf32, #tpu.memory_space<vmem>>, vector<4x1xf32>
      tpu.vector_store %arg10[%c0_19, %c0_20], %25 {strides = array<i32>} : memref<4x1xf32, #tpu.memory_space<vmem>>, vector<4x1xf32>,
    } else {
    }
    %c0 = arith.constant 0 : index
    %c0_2 = arith.constant 0 : index
    %c0_3 = arith.constant 0 : index
    %5 = vector.load %arg2[%c0, %c0_2, %c0_3] : memref<1x4x256xf32, #tpu.memory_space<vmem>>, vector<1x4x256xf32>
    %6 = vector.shape_cast %5 : vector<1x4x256xf32> to vector<4x256xf32>
    %c0_4 = arith.constant 0 : index
    %c0_5 = arith.constant 0 : index
    %7 = vector.load %arg9[%c0_4, %c0_5] : memref<4x1xf32, #tpu.memory_space<vmem>>, vector<4x1xf32>
    %cst = arith.constant dense<0.000000e+00> : vector<4xf32>
    %8 = vector.multi_reduction <add>, %6, %cst [1] : vector<4x256xf32> to vector<4xf32>
    %9 = vector.shape_cast %8 : vector<4xf32> to vector<4x1xf32>
    %10 = arith.addf %7, %9 : vector<4x1xf32>
    %c0_6 = arith.constant 0 : index
    %c0_7 = arith.constant 0 : index
    %11 = vector.load %arg9[%c0_6, %c0_7] : memref<4x1xf32, #tpu.memory_space<vmem>>, vector<4x1xf32>
    tpu.vector_store %arg9[%c0_6, %c0_7], %10 {strides = array<i32>} : memref<4x1xf32, #tpu.memory_space<vmem>>, vector<4x1xf32>,
    %c0_8 = arith.constant 0 : index
    %c0_9 = arith.constant 0 : index
    %12 = vector.load %arg10[%c0_8, %c0_9] : memref<4x1xf32, #tpu.memory_space<vmem>>, vector<4x1xf32>
    %13 = arith.mulf %6, %6 : vector<4x256xf32>
    %cst_10 = arith.constant dense<0.000000e+00> : vector<4xf32>
    %14 = vector.multi_reduction <add>, %13, %cst_10 [1] : vector<4x256xf32> to vector<4xf32>
    %15 = vector.shape_cast %14 : vector<4xf32> to vector<4x1xf32>
    %16 = arith.addf %12, %15 : vector<4x1xf32>
    %c0_11 = arith.constant 0 : index
    %c0_12 = arith.constant 0 : index
    %17 = vector.load %arg10[%c0_11, %c0_12] : memref<4x1xf32, #tpu.memory_space<vmem>>, vector<4x1xf32>
    tpu.vector_store %arg10[%c0_11, %c0_12], %16 {strides = array<i32>} : memref<4x1xf32, #tpu.memory_space<vmem>>, vector<4x1xf32>,
    %c1_i32 = arith.constant 1 : i32
    %18 = arith.cmpi eq, %arg0, %c1_i32 : i32
    %c0_i32_13 = arith.constant 0 : i32
    %19 = arith.cmpi eq, %arg1, %c0_i32_13 : i32
    %20 = arith.andi %18, %19 : i1
    %21 = arith.extui %20 : i1 to i32
    %c0_i32_14 = arith.constant 0 : i32
    %22 = arith.cmpi ne, %21, %c0_i32_14 : i32
    scf.if %22 {
      %c0_15 = arith.constant 0 : index
      %c0_16 = arith.constant 0 : index
      %23 = vector.load %arg9[%c0_15, %c0_16] : memref<4x1xf32, #tpu.memory_space<vmem>>, vector<4x1xf32>
      %cst_17 = arith.constant 0.001953125 : f32
      %24 = vector.broadcast %cst_17 : f32 to vector<4x1xf32>
      %25 = arith.mulf %23, %24 : vector<4x1xf32>
      %c0_18 = arith.constant 0 : index
      %c0_19 = arith.constant 0 : index
      %26 = vector.load %arg10[%c0_18, %c0_19] : memref<4x1xf32, #tpu.memory_space<vmem>>, vector<4x1xf32>
      %cst_20 = arith.constant 0.001953125 : f32
      %27 = vector.broadcast %cst_20 : f32 to vector<4x1xf32>
      %28 = arith.mulf %26, %27 : vector<4x1xf32>
      %29 = arith.mulf %25, %25 : vector<4x1xf32>
      %30 = arith.subf %28, %29 : vector<4x1xf32>
      %cst_21 = arith.constant 0.000000e+00 : f32
      %31 = vector.broadcast %cst_21 : f32 to vector<4x1xf32>
      %32 = arith.maximumf %30, %31 : vector<4x1xf32>
      %c0_22 = arith.constant 0 : index
      %c0_23 = arith.constant 0 : index
      %33 = vector.load %arg3[%c0_22, %c0_23] : memref<4x1xf32, #tpu.memory_space<vmem>>, vector<4x1xf32>
      %cst_24 = arith.constant 9.99999974E-6 : f32
      %34 = vector.broadcast %cst_24 : f32 to vector<4x1xf32>
      %35 = arith.addf %32, %34 : vector<4x1xf32>
      %36 = math.rsqrt %35 : vector<4x1xf32>
      %37 = arith.mulf %33, %36 : vector<4x1xf32>
      %c0_25 = arith.constant 0 : index
      %c0_26 = arith.constant 0 : index
      %38 = vector.load %arg4[%c0_25, %c0_26] : memref<4x1xf32, #tpu.memory_space<vmem>>, vector<4x1xf32>
      %39 = arith.mulf %25, %37 : vector<4x1xf32>
      %40 = arith.subf %38, %39 : vector<4x1xf32>
      %c0_27 = arith.constant 0 : index
      %c0_28 = arith.constant 0 : index
      %41 = vector.load %arg7[%c0_27, %c0_28] : memref<4x1xf32, #tpu.memory_space<vmem>>, vector<4x1xf32>
      tpu.vector_store %arg7[%c0_27, %c0_28], %25 {strides = array<i32>} : memref<4x1xf32, #tpu.memory_space<vmem>>, vector<4x1xf32>,
      %c0_29 = arith.constant 0 : index
      %c0_30 = arith.constant 0 : index
      %42 = vector.load %arg8[%c0_29, %c0_30] : memref<4x1xf32, #tpu.memory_space<vmem>>, vector<4x1xf32>
      tpu.vector_store %arg8[%c0_29, %c0_30], %32 {strides = array<i32>} : memref<4x1xf32, #tpu.memory_space<vmem>>, vector<4x1xf32>,
      %c0_31 = arith.constant 0 : index
      %c0_32 = arith.constant 0 : index
      %43 = vector.load %arg5[%c0_31, %c0_32] : memref<4x1xf32, #tpu.memory_space<vmem>>, vector<4x1xf32>
      tpu.vector_store %arg5[%c0_31, %c0_32], %37 {strides = array<i32>} : memref<4x1xf32, #tpu.memory_space<vmem>>, vector<4x1xf32>,
      %c0_33 = arith.constant 0 : index
      %c0_34 = arith.constant 0 : index
      %44 = vector.load %arg6[%c0_33, %c0_34] : memref<4x1xf32, #tpu.memory_space<vmem>>, vector<4x1xf32>
      tpu.vector_store %arg6[%c0_33, %c0_34], %40 {strides = array<i32>} : memref<4x1xf32, #tpu.memory_space<vmem>>, vector<4x1xf32>,
    } else {
    }
    return
  }
  func.func @transform_0(%arg0: i32, %arg1: i32) -> (i32, i32, i32) {
    %c0_i32 = arith.constant 0 : i32
    %c0_i32_0 = arith.constant 0 : i32
    return %arg0, %c0_i32, %arg1 : i32, i32, i32
  }
  func.func @transform_1(%arg0: i32, %arg1: i32) -> (i32, i32) {
    %c0_i32 = arith.constant 0 : i32
    %c0_i32_0 = arith.constant 0 : i32
    %c0_i32_1 = arith.constant 0 : i32
    return %c0_i32, %c0_i32_0 : i32, i32
  }
  func.func @transform_2(%arg0: i32, %arg1: i32) -> (i32, i32) {
    %c0_i32 = arith.constant 0 : i32
    %c0_i32_0 = arith.constant 0 : i32
    %c0_i32_1 = arith.constant 0 : i32
    return %c0_i32, %c0_i32_0 : i32, i32
  }
  func.func @transform_3(%arg0: i32, %arg1: i32) -> (i32, i32) {
    %c0_i32 = arith.constant 0 : i32
    %c0_i32_0 = arith.constant 0 : i32
    %c0_i32_1 = arith.constant 0 : i32
    return %c0_i32, %c0_i32_0 : i32, i32
  }
  func.func @transform_4(%arg0: i32, %arg1: i32) -> (i32, i32) {
    %c0_i32 = arith.constant 0 : i32
    %c0_i32_0 = arith.constant 0 : i32
    %c0_i32_1 = arith.constant 0 : i32
    return %c0_i32, %c0_i32_0 : i32, i32
  }
  func.func @transform_5(%arg0: i32, %arg1: i32) -> (i32, i32) {
    %c0_i32 = arith.constant 0 : i32
    %c0_i32_0 = arith.constant 0 : i32
    %c0_i32_1 = arith.constant 0 : i32
    return %c0_i32, %c0_i32_0 : i32, i32
  }
  func.func @transform_6(%arg0: i32, %arg1: i32) -> (i32, i32) {
    %c0_i32 = arith.constant 0 : i32
    %c0_i32_0 = arith.constant 0 : i32
    %c0_i32_1 = arith.constant 0 : i32
    return %c0_i32, %c0_i32_0 : i32, i32
  }
}

</mosaic_0001>

<llo_original>
// kernel: tpu_custom_call.1
$region0: #{tpu_custom_call.1}
  #allocation0 [shape = 'u32[]', space=smem, size = 0x4, offset = 0x4, fixed_abs, tag = 'smem constant byte address 0x4 - core index']
  #allocation1 [shape = 'u32[144,128]{1,0:T(1,128)}', space=vmem, size = 0x12000, scoped, tag = 'internal scratch']
  #allocation2 [shape = 'f32[4,1]{1,0:T(4,128)}', space=vmem, size = 0x800, scoped, tag = 'scratch operand']
  #allocation3 [shape = 'f32[4,1]{1,0:T(4,128)}', space=vmem, size = 0x800, scoped, tag = 'scratch operand']
  %s0 = inlined_call_operand.hbm [shape: f32[2,4,256], index: 0, kind: input, shape index: {}]
  %s1 = inlined_call_operand.vmem [shape: f32[4,1], index: 1, kind: input, shape index: {}]
  %s2 = inlined_call_operand.vmem [shape: f32[4,1], index: 2, kind: input, shape index: {}]
  %s3 = inlined_call_operand.vmem [shape: f32[4,1], index: 3, kind: output, shape index: {0}]
  %s4 = inlined_call_operand.vmem [shape: f32[4,1], index: 4, kind: output, shape index: {1}]
  %s5 = inlined_call_operand.vmem [shape: f32[4,1], index: 5, kind: output, shape index: {2}]
  %s6 = inlined_call_operand.vmem [shape: f32[4,1], index: 6, kind: output, shape index: {3}]
  %7 = xla_tuple %s3, %s4, %s5, %s6
  %s8 = sld [smem:[#allocation0]]
  $region81: #{tpu_custom_call.1} parent=0
    _
  %s10 = ssub.s32 1, %s8
  %s11 = scalar_select 0, %s10, %s8
  $region1: #{tpu_custom_call.1} parent=0
    #allocation4 [shape = 'u8[8192]{0}', space=vmem, size = 0x2000, scoped, tag = 'input window, operand 0']
    #allocation5 [shape = 's32[2]{0}', space=sflag, size = 0x8, scoped, tag = 'scoped memory for tpu_custom_call.1']
    %12 = vsyncpa [#allocation5], 0
    %s13 = scalar_lea.sflag [#allocation5], 1
    %14 = vsyncpa %s13, 0
    loop: start=0, step=1, limit=4
    $region2: #{tpu_custom_call.1} parent=1 // loop_pre_header
      _
    $region3: #{tpu_custom_call.1} parent=1 // loop_header
      %s16 = sphi 0, %s20
      %p17 = scmp.ge.s32.totalorder %s16, 4
      %s23 = sphi 0, %s35
      %s24 = sphi 0, %s31
      %s25 = sphi 0, %s23
      %s26 = sphi 0, %s24
      %s27 = sphi 0, %s25
      %s28 = sphi 0, %s26
      %s40 = sphi 0, %s42
      %s43 = sphi 0, %s40
      %s44 = sphi 0, %s43
      %s60 = sphi 0, %s44
      %s64 = sphi 0, %s64
      %s66 = sphi 0, %s64
      %s67 = sphi 0, %s66
      %s81 = sphi 0, %s67
      %s85 = sphi 0, %s85
      %s87 = sphi 0, %s85
      %s88 = sphi 0, %s87
      %s102 = sphi 0, %s88
      %s106 = sphi 0, %s106
      %s108 = sphi 0, %s106
      %s109 = sphi 0, %s108
      %s123 = sphi 0, %s109
      %s127 = sphi 0, %s127
      %s129 = sphi 0, %s127
      %s130 = sphi 0, %s129
      %s144 = sphi 0, %s130
      %s148 = sphi 0, %s148
      %s150 = sphi 0, %s148
      %s151 = sphi 0, %s150
      %s165 = sphi 0, %s151
      %s169 = sphi 0, %s169
      %s171 = sphi 0, %s169
      %s172 = sphi 0, %s171
      %s186 = sphi 0, %s172
    $region4: #{tpu_custom_call.1} parent=1 // loop_header_branch
      %19 = sbr.rel (%p17) target = $region8
    $region5: #{tpu_custom_call.1} parent=1 // loop_body
      %s21 = ssub.s32 %s16, 1
      %s22 = ssub.s32 %s16, 2
      %s29 = sadd.s32 1, %s24
      %p30 = scmp.ge.s32.totalorder %s29, 1
      %s31 = scalar_select %p30, 0, %s29
      %s32 = sadd.s32 1, %s23
      %s33 = scalar_select %p30, %s32, %s23
      %p34 = scmp.ge.s32.totalorder %s33, 2
      %s35 = scalar_select %p34, 0, %s33
      %s36 = ssub.s32 %s23, %s35
      %s37 = ssub.s32 %s24, %s31
      %s38 = sor.u32 %s36, %s37
      %p39 = scmp.eq.s32.totalorder %s38, 0
      %s41 = sadd.s32 %s40, 1
      %s42 = scalar_select %p39, %s40, %s41
      %p45 = pneg %p39
      %p46 = scmp.eq.s32.totalorder %s16, 1
      %p47 = por %p45, %p46
      %p48 = scmp.ne.s32.totalorder %s40, %s43
      %p49 = scmp.eq.s32.totalorder %s16, 0
      %p50 = por %p48, %p49
      %p51 = scmp.ne.s32.totalorder %s40, %s43
      %p52 = scmp.eq.s32.totalorder %s21, 1
      %p53 = por %p51, %p52
      %p54 = scmp.ne.s32.totalorder %s43, %s44
      %p55 = scmp.eq.s32.totalorder %s21, 0
      %p56 = por %p54, %p55
      %p57 = scmp.ne.s32.totalorder %s43, %s44
      %p58 = scmp.eq.s32.totalorder %s22, 1
      %p59 = por %p57, %p58
      %p61 = scmp.ne.s32.totalorder %s44, %s60
      %p62 = scmp.eq.s32.totalorder %s22, 0
      %p63 = por %p61, %p62
      %s65 = sadd.s32 %s64, 1
      %p68 = scmp.eq.s32.totalorder %s16, 1
      %p69 = scmp.ne.s32.totalorder %s64, %s66
      %p70 = scmp.eq.s32.totalorder %s16, 0
      %p71 = por %p69, %p70
      %p72 = scmp.ne.s32.totalorder %s64, %s66
      %p73 = scmp.eq.s32.totalorder %s21, 1
      %p74 = por %p72, %p73
      %p75 = scmp.ne.s32.totalorder %s66, %s67
      %p76 = scmp.eq.s32.totalorder %s21, 0
      %p77 = por %p75, %p76
      %p78 = scmp.ne.s32.totalorder %s66, %s67
      %p79 = scmp.eq.s32.totalorder %s22, 1
      %p80 = por %p78, %p79
      %p82 = scmp.ne.s32.totalorder %s67, %s81
      %p83 = scmp.eq.s32.totalorder %s22, 0
      %p84 = por %p82, %p83
      %s86 = sadd.s32 %s85, 1
      %p89 = scmp.eq.s32.totalorder %s16, 1
      %p90 = scmp.ne.s32.totalorder %s85, %s87
      %p91 = scmp.eq.s32.totalorder %s16, 0
      %p92 = por %p90, %p91
      %p93 = scmp.ne.s32.totalorder %s85, %s87
      %p94 = scmp.eq.s32.totalorder %s21, 1
      %p95 = por %p93, %p94
      %p96 = scmp.ne.s32.totalorder %s87, %s88
      %p97 = scmp.eq.s32.totalorder %s21, 0
      %p98 = por %p96, %p97
      %p99 = scmp.ne.s32.totalorder %s87, %s88
      %p100 = scmp.eq.s32.totalorder %s22, 1
      %p101 = por %p99, %p100
      %p103 = scmp.ne.s32.totalorder %s88, %s102
      %p104 = scmp.eq.s32.totalorder %s22, 0
      %p105 = por %p103, %p104
      %s107 = sadd.s32 %s106, 1
      %p110 = scmp.eq.s32.totalorder %s16, 1
      %p111 = scmp.ne.s32.totalorder %s106, %s108
      %p112 = scmp.eq.s32.totalorder %s16, 0
      %p113 = por %p111, %p112
      %p114 = scmp.ne.s32.totalorder %s106, %s108
      %p115 = scmp.eq.s32.totalorder %s21, 1
      %p116 = por %p114, %p115
      %p117 = scmp.ne.s32.totalorder %s108, %s109
      %p118 = scmp.eq.s32.totalorder %s21, 0
      %p119 = por %p117, %p118
      %p120 = scmp.ne.s32.totalorder %s108, %s109
      %p121 = scmp.eq.s32.totalorder %s22, 1
      %p122 = por %p120, %p121
      %p124 = scmp.ne.s32.totalorder %s109, %s123
      %p125 = scmp.eq.s32.totalorder %s22, 0
      %p126 = por %p124, %p125
      %s128 = sadd.s32 %s127, 1
      %p131 = scmp.eq.s32.totalorder %s16, 1
      %p132 = scmp.ne.s32.totalorder %s127, %s129
      %p133 = scmp.eq.s32.totalorder %s16, 0
      %p134 = por %p132, %p133
      %p135 = scmp.ne.s32.totalorder %s127, %s129
      %p136 = scmp.eq.s32.totalorder %s21, 1
      %p137 = por %p135, %p136
      %p138 = scmp.ne.s32.totalorder %s129, %s130
      %p139 = scmp.eq.s32.totalorder %s21, 0
      %p140 = por %p138, %p139
      %p141 = scmp.ne.s32.totalorder %s129, %s130
      %p142 = scmp.eq.s32.totalorder %s22, 1
      %p143 = por %p141, %p142
      %p145 = scmp.ne.s32.totalorder %s130, %s144
      %p146 = scmp.eq.s32.totalorder %s22, 0
      %p147 = por %p145, %p146
      %s149 = sadd.s32 %s148, 1
      %p152 = scmp.eq.s32.totalorder %s16, 1
      %p153 = scmp.ne.s32.totalorder %s148, %s150
      %p154 = scmp.eq.s32.totalorder %s16, 0
      %p155 = por %p153, %p154
      %p156 = scmp.ne.s32.totalorder %s148, %s150
      %p157 = scmp.eq.s32.totalorder %s21, 1
      %p158 = por %p156, %p157
      %p159 = scmp.ne.s32.totalorder %s150, %s151
      %p160 = scmp.eq.s32.totalorder %s21, 0
      %p161 = por %p159, %p160
      %p162 = scmp.ne.s32.totalorder %s150, %s151
      %p163 = scmp.eq.s32.totalorder %s22, 1
      %p164 = por %p162, %p163
      %p166 = scmp.ne.s32.totalorder %s151, %s165
      %p167 = scmp.eq.s32.totalorder %s22, 0
      %p168 = por %p166, %p167
      %s170 = sadd.s32 %s169, 1
      %p173 = scmp.eq.s32.totalorder %s16, 1
      %p174 = scmp.ne.s32.totalorder %s169, %s171
      %p175 = scmp.eq.s32.totalorder %s16, 0
      %p176 = por %p174, %p175
      %p177 = scmp.ne.s32.totalorder %s169, %s171
      %p178 = scmp.eq.s32.totalorder %s21, 1
      %p179 = por %p177, %p178
      %p180 = scmp.ne.s32.totalorder %s171, %s172
      %p181 = scmp.eq.s32.totalorder %s21, 0
      %p182 = por %p180, %p181
      %p183 = scmp.ne.s32.totalorder %s171, %s172
      %p184 = scmp.eq.s32.totalorder %s22, 1
      %p185 = por %p183, %p184
      %p187 = scmp.ne.s32.totalorder %s172, %s186
      %p188 = scmp.eq.s32.totalorder %s22, 0
      %p189 = por %p187, %p188
      %p190 = scmp.le.s32.totalorder 1, %s16
      %p191 = scmp.lt.s32.totalorder %s16, 3
      %p192 = pnand %p190, %p191
      %p193 = pneg %p192
      // Predicated region
      $region9: #{tpu_custom_call.1} parent=5 // pred_check
        _
      $region10: #{tpu_custom_call.1} parent=5 // pred_check_branch
        %195 = sbr.rel (%p192) target = $region12
      $region11: #{tpu_custom_call.1} parent=5 // pred_region
        %s196 = ssub.s32 %s16, 1
        // Predicated region
        $region13: #{tpu_custom_call.1} parent=11 // pred_check
          %p197 = pneg %p77
        $region14: #{tpu_custom_call.1} parent=11 // pred_check_branch
          %199 = sbr.rel (%p197) target = $region16
        $region15: #{tpu_custom_call.1} parent=11 // pred_region
          _
        $region16: #{tpu_custom_call.1} parent=11 // pred_fallthru
          _
        // Predicated region
        $region17: #{tpu_custom_call.1} parent=11 // pred_check
          %p200 = pneg %p98
        $region18: #{tpu_custom_call.1} parent=11 // pred_check_branch
          %202 = sbr.rel (%p200) target = $region20
        $region19: #{tpu_custom_call.1} parent=11 // pred_region
          _
        $region20: #{tpu_custom_call.1} parent=11 // pred_fallthru
          _
      $region12: #{tpu_custom_call.1} parent=5 // pred_fallthru
        _
      %p203 = scmp.lt.s32.totalorder %s16, 2
      // Predicated region
      $region21: #{tpu_custom_call.1} parent=5 // pred_check
        %p204 = pneg %p203
      $region22: #{tpu_custom_call.1} parent=5 // pred_check_branch
        %206 = sbr.rel (%p204) target = $region24
      $region23: #{tpu_custom_call.1} parent=5 // pred_region
        // Predicated region
        $region25: #{tpu_custom_call.1} parent=23 // pred_check
          %p207 = pneg %p50
        $region26: #{tpu_custom_call.1} parent=23 // pred_check_branch
          %209 = sbr.rel (%p207) target = $region28
        $region27: #{tpu_custom_call.1} parent=23 // pred_region
          %s210 = sand.u32 %s40, 1
          %s211 = scalar_lea.sflag [#allocation5], %s210
          %s212 = sand.u32 %s40, 1
          %s213 = smul.addr %s212, 8
          %s214 = scalar_lea.vmem [#allocation4], %s213
          %s215 = smul.u32 2, %s24
          %s217 = ssub.s32 128, 128
          %218 = vsyncadd %s211, %s217
          %s219 = smul.addr %s23, 2
          %s220 = sadd.s32 %s215, %s219
          %s221 = smul.addr %s220, 64
          %s222 = scalar_lea.hbm %s0, %s221
          %s224 = sshll.u32 %s214, 4
          %s225 = int_to_ptr.vmem [resolvable:$true] %s224
          %227 = dma.hbm_to_vmem [thread:$0]  %s222, 128, %s225, %s211
        $region28: #{tpu_custom_call.1} parent=23 // pred_fallthru
          _
      $region24: #{tpu_custom_call.1} parent=5 // pred_fallthru
        _
      %p228 = scmp.le.s32.totalorder 1, %s16
      %p229 = scmp.lt.s32.totalorder %s16, 3
      %p230 = pnand %p228, %p229
      %p231 = pneg %p230
      // Predicated region
      $region29: #{tpu_custom_call.1} parent=5 // pred_check
        _
      $region30: #{tpu_custom_call.1} parent=5 // pred_check_branch
        %233 = sbr.rel (%p230) target = $region32
      $region31: #{tpu_custom_call.1} parent=5 // pred_region
        %s234 = ssub.s32 %s16, 1
        %s235 = sand.u32 %s43, 1
        %s236 = scalar_lea.sflag [#allocation5], %s235
        %s237 = sand.u32 %s43, 1
        %s238 = smul.addr %s237, 8
        %s239 = scalar_lea.vmem [#allocation4], %s238
        // Predicated region
        $region33: #{tpu_custom_call.1} parent=31 // pred_check
          %p240 = pneg %p56
        $region34: #{tpu_custom_call.1} parent=31 // pred_check_branch
          %242 = sbr.rel (%p240) target = $region36
        $region35: #{tpu_custom_call.1} parent=31 // pred_region
          %243 = dma.done %s236, 128
        $region36: #{tpu_custom_call.1} parent=31 // pred_fallthru
          _
        %s244 = sand.u32 %s43, 1
        %s245 = scalar_lea.sflag [#allocation5], %s244
        %s246 = sand.u32 %s43, 1
        %s247 = smul.addr %s246, 8
        %s248 = scalar_lea.vmem [#allocation4], %s247
        %p249 = pneg %p56
        %p250 = pneg %p53
        %p251 = pneg %p77
        %p252 = pneg %p74
        %p253 = pneg %p98
        %p254 = pneg %p95
        %p255 = pneg %p119
        %p256 = pneg %p116
        %p257 = pneg %p140
        %p258 = pneg %p137
        %p259 = pneg %p161
        %p260 = pneg %p158
        %p261 = pneg %p182
        %p262 = pneg %p179
        %s263 = smul.u32 2, %s26
        %p264 = scmp.eq.s32.totalorder %s25, 0
        %p265 = scmp.eq.s32.totalorder %s26, 0
        %p266 = pnand %p264, %p265
        %p267 = pneg %p266
        // Predicated region
        $region37: #{tpu_custom_call.1} parent=31 // pred_check
          _
        $region38: #{tpu_custom_call.1} parent=31 // pred_check_branch
          %269 = sbr.rel (%p266) target = $region40
        $region39: #{tpu_custom_call.1} parent=31 // pred_region
          %vm270 = vcmask 3072
          %271 = vst.msk [vmem:[#allocation2] sm:$0xf] %vm270, 0.0
          %272 = vst.msk [vmem:[#allocation3] sm:$0xf] %vm270, 0.0
        $region40: #{tpu_custom_call.1} parent=31 // pred_fallthru
          _
        %v273 = vld [vmem:[%s239] sm:$0xff]
        %v274 = vld [vmem:[#allocation2] sm:$0xf]
        %v276 = vcombine.high %v273, %v273
        %vm278 = vcmask 1043456
        %v279 = vsel %vm278, %v273, 0.0
        %v280 = vsel %vm278, %v276, 0.0
        %v281 = vadd.f32 %v279, %v280
        %282 = vadd.xlane.f32.xlu0 %v281
        %v283 = vpop.xlane.xlu0 %282
        %v284 = vadd.f32 %v274, %v283
        %vm285 = vcmask 3072
        %286 = vst.msk [vmem:[#allocation2] sm:$0xf] %vm285, %v284
        %v287 = vld [vmem:[#allocation3] sm:$0xf]
        %v288 = vmul.f32 %v273, %v273
        %v290 = vcombine.high %v288, %v288
        %v292 = vsel %vm278, %v288, 0.0
        %v293 = vsel %vm278, %v290, 0.0
        %v294 = vadd.f32 %v292, %v293
        %295 = vadd.xlane.f32.xlu0 %v294
        %v296 = vpop.xlane.xlu0 %295
        %v297 = vadd.f32 %v287, %v296
        %298 = vst.msk [vmem:[#allocation3] sm:$0xf] %vm285, %v297
        %p299 = scmp.eq.s32.totalorder %s25, 1
        %p300 = pnand %p299, %p265
        %p301 = pneg %p300
        // Predicated region
        $region41: #{tpu_custom_call.1} parent=31 // pred_check
          _
        $region42: #{tpu_custom_call.1} parent=31 // pred_check_branch
          %303 = sbr.rel (%p300) target = $region44
        $region43: #{tpu_custom_call.1} parent=31 // pred_region
          %v304 = vld [vmem:[#allocation2] sm:$0xf]
          %v305 = vmul.f32 %v304, 0.001953125
          %v306 = vld [vmem:[#allocation3] sm:$0xf]
          %v307 = vmul.f32 %v306, 0.001953125
          %v308 = vmul.f32 %v305, %v305
          %v309 = vsub.f32 %v307, %v308
          %v310 = vmax.f32 %v309, 0.0
          %v311 = vld [vmem:[%s1] sm:$0xf]
          %v312 = vadd.f32 %v310, 1e-05
          %v313 = vrsqrt.pop %v312
          %v314 = vmul.f32 %v311, %v313
          %v315 = vld [vmem:[%s2] sm:$0xf]
          %v316 = vmul.f32 %v305, %v314
          %v317 = vsub.f32 %v315, %v316
          %318 = vst.msk [vmem:[%s5] sm:$0xf] %vm285, %v305
          %319 = vst.msk [vmem:[%s6] sm:$0xf] %vm285, %v310
          %320 = vst.msk [vmem:[%s3] sm:$0xf] %vm285, %v314
          %321 = vst.msk [vmem:[%s4] sm:$0xf] %vm285, %v317
        $region44: #{tpu_custom_call.1} parent=31 // pred_fallthru
          _
        // Predicated region
        $region45: #{tpu_custom_call.1} parent=31 // pred_check
          %p322 = pneg %p116
        $region46: #{tpu_custom_call.1} parent=31 // pred_check_branch
          %324 = sbr.rel (%p322) target = $region48
        $region47: #{tpu_custom_call.1} parent=31 // pred_region
          _
        $region48: #{tpu_custom_call.1} parent=31 // pred_fallthru
          _
        // Predicated region
        $region49: #{tpu_custom_call.1} parent=31 // pred_check
          %p325 = pneg %p137
        $region50: #{tpu_custom_call.1} parent=31 // pred_check_branch
          %327 = sbr.rel (%p325) target = $region52
        $region51: #{tpu_custom_call.1} parent=31 // pred_region
          _
        $region52: #{tpu_custom_call.1} parent=31 // pred_fallthru
          _
        // Predicated region
        $region53: #{tpu_custom_call.1} parent=31 // pred_check
          %p328 = pneg %p158
        $region54: #{tpu_custom_call.1} parent=31 // pred_check_branch
          %330 = sbr.rel (%p328) target = $region56
        $region55: #{tpu_custom_call.1} parent=31 // pred_region
          _
        $region56: #{tpu_custom_call.1} parent=31 // pred_fallthru
          _
        // Predicated region
        $region57: #{tpu_custom_call.1} parent=31 // pred_check
          %p331 = pneg %p179
        $region58: #{tpu_custom_call.1} parent=31 // pred_check_branch
          %333 = sbr.rel (%p331) target = $region60
        $region59: #{tpu_custom_call.1} parent=31 // pred_region
          _
        $region60: #{tpu_custom_call.1} parent=31 // pred_fallthru
          _
        // Predicated region
        $region61: #{tpu_custom_call.1} parent=31 // pred_check
          %p334 = pneg %p116
        $region62: #{tpu_custom_call.1} parent=31 // pred_check_branch
          %336 = sbr.rel (%p334) target = $region64
        $region63: #{tpu_custom_call.1} parent=31 // pred_region
          _
        $region64: #{tpu_custom_call.1} parent=31 // pred_fallthru
          _
        // Predicated region
        $region65: #{tpu_custom_call.1} parent=31 // pred_check
          %p337 = pneg %p137
        $region66: #{tpu_custom_call.1} parent=31 // pred_check_branch
          %339 = sbr.rel (%p337) target = $region68
        $region67: #{tpu_custom_call.1} parent=31 // pred_region
          _
        $region68: #{tpu_custom_call.1} parent=31 // pred_fallthru
          _
        // Predicated region
        $region69: #{tpu_custom_call.1} parent=31 // pred_check
          %p340 = pneg %p158
        $region70: #{tpu_custom_call.1} parent=31 // pred_check_branch
          %342 = sbr.rel (%p340) target = $region72
        $region71: #{tpu_custom_call.1} parent=31 // pred_region
          _
        $region72: #{tpu_custom_call.1} parent=31 // pred_fallthru
          _
        // Predicated region
        $region73: #{tpu_custom_call.1} parent=31 // pred_check
          %p343 = pneg %p179
        $region74: #{tpu_custom_call.1} parent=31 // pred_check_branch
          %345 = sbr.rel (%p343) target = $region76
        $region75: #{tpu_custom_call.1} parent=31 // pred_region
          _
        $region76: #{tpu_custom_call.1} parent=31 // pred_fallthru
          _
      $region32: #{tpu_custom_call.1} parent=5 // pred_fallthru
        _
      %p346 = scmp.le.s32.totalorder 2, %s16
      // Predicated region
      $region77: #{tpu_custom_call.1} parent=5 // pred_check
        %p347 = pneg %p346
      $region78: #{tpu_custom_call.1} parent=5 // pred_check_branch
        %349 = sbr.rel (%p347) target = $region80
      $region79: #{tpu_custom_call.1} parent=5 // pred_region
        %s350 = ssub.s32 %s16, 2
      $region80: #{tpu_custom_call.1} parent=5 // pred_fallthru
        _
    $region6: #{tpu_custom_call.1} parent=1 // loop_footer
      %s20 = sadd.s32 1, %s16
    $region7: #{tpu_custom_call.1} parent=1 // loop_footer_branch
      %15 = sbr.rel target = $region3
    $region8: #{tpu_custom_call.1} parent=1 // loop_exit
      _
    %351 = vsyncpa [#allocation5], 1
    %s352 = scalar_lea.sflag [#allocation5], 1
    %353 = vsyncpa %s352, 1

</llo_original>
